<compile_context>
chip_gen: v7x
topology: tpu7x:2x2x1
jax: 0.10.0
libtpu: 0.0.40
codegen_flags: <defaults>
</compile_context>

<pallas_src>
import jax
import jax.numpy as jnp
from jax.experimental import pallas as pl
from jax.experimental.pallas import tpu as pltpu

_LANE = 128
_SUBLANE = 8


def _round_up(n, m):
    return ((n + m - 1) // m) * m


def _mlp_kernel(x_ref,
                w1_ref, b1_ref,
                w2_ref, b2_ref,
                w3_ref, b3_ref,
                w4_ref, b4_ref,
                o_ref):
    # Entire forward fused: 4 MXU matmuls + VPU/EUP activations on one batch tile.
    # Weights may be bf16; accumulation and all elementwise math stay f32.
    mm = w1_ref.dtype
    x = x_ref[...].astype(mm)
    h = jnp.tanh(jnp.dot(x, w1_ref[...], preferred_element_type=jnp.float32) + b1_ref[...])
    h = jnp.tanh(jnp.dot(h.astype(mm), w2_ref[...], preferred_element_type=jnp.float32) + b2_ref[...])
    h = jnp.tanh(jnp.dot(h.astype(mm), w3_ref[...], preferred_element_type=jnp.float32) + b3_ref[...])
    z = jnp.dot(h.astype(mm), w4_ref[...], preferred_element_type=jnp.float32) + b4_ref[...]
    # sigmoid(z) == 0.5 * (tanh(0.5*z) + 1): one EUP push instead of exp + reciprocal.
    o_ref[...] = (0.5 * (jnp.tanh(0.5 * z) + 1.0)).astype(o_ref.dtype)


def init_generator1_params(key, input_size, h1, h2, h3, output_size):
    """PyTorch nn.Linear-style init (U[-1/sqrt(fan_in), 1/sqrt(fan_in)]), W stored (in, out)."""
    dims = [(input_size, h1), (h1, h2), (h2, h3), (h3, output_size)]
    params = {}
    for idx, (fan_in, fan_out) in enumerate(dims, start=1):
        key, kw, kb = jax.random.split(key, 3)
        bound = 1.0 / jnp.sqrt(jnp.float32(fan_in))
        params[f"w{idx}"] = jax.random.uniform(
            kw, (fan_in, fan_out), jnp.float32, minval=-bound, maxval=bound)
        params[f"b{idx}"] = jax.random.uniform(
            kb, (1, fan_out), jnp.float32, minval=-bound, maxval=bound)
    return params


def prepare_generator1_params(params, input_size, matmul_dtype=jnp.float32):
    """One-time prep: zero-pad every feature dim to a multiple of 128 (lane-dense loads,
    full MXU columns, unmasked stores). Zero padding is exact: padded hidden units stay 0
    through tanh; padded output columns are sliced off by the wrapper.
    Weights optionally stored in bf16 for the MXU; biases stay f32."""
    prev_p = _round_up(input_size, _LANE)
    ws, bs = [], []
    for idx in range(1, 5):
        w, b = params[f"w{idx}"], params[f"b{idx}"]
        fi, fo = w.shape
        fo_p = _round_up(fo, _LANE)
        wp = jnp.zeros((prev_p, fo_p), jnp.float32).at[:fi, :fo].set(w).astype(matmul_dtype)
        bp = jnp.zeros((1, fo_p), jnp.float32).at[:, :fo].set(b)
        ws.append(wp)
        bs.append(bp)
        prev_p = fo_p
    return {"ws": ws, "bs": bs, "d_in": input_size, "d_out": params["w4"].shape[1]}


def generator1_forward(x, prep, *, batch_tile=512):
    """x: (B, input_size) float32. prep: output of prepare_generator1_params."""
    B, d_in = x.shape
    assert d_in == prep["d_in"], "input feature dim mismatch"
    ws, bs = prep["ws"], prep["bs"]
    d_in_p = ws[0].shape[0]
    d_out_p = ws[3].shape[1]
    d_out = prep["d_out"]

    # Bounded batch tile (multiple of 8). When B >= 16, keep at least 2 grid steps so
    # the "parallel" batch axis can shard across both TensorCores on v7x.
    tb = int(min(batch_tile, _round_up(max(B // 2, _SUBLANE), _SUBLANE)))
    Bp = _round_up(B, tb)
    # Per-step VMEM (x/out tiles double-buffered + single-buffered weights) at tb=512 is
    # ~1.3 MiB for these widths -> comfortably inside v7x's 32 MiB default scoped limit,
    # so no vmem_limit_bytes override is needed.

    xp = x
    if Bp != B or d_in_p != d_in:
        xp = jnp.zeros((Bp, d_in_p), x.dtype).at[:B, :d_in].set(x)

    grid = (Bp // tb,)

    def build(single_buffer_consts):
        if single_buffer_consts:
            # Constant index_map -> no need to double-buffer; halves their VMEM footprint
            # and removes per-step DMA descriptor work for the 8 invariant operands.
            def const2d(arr):
                return pl.BlockSpec(arr.shape, lambda i: (0, 0),
                                    pipeline_mode=pl.Buffered(1))
        else:
            def const2d(arr):
                return pl.BlockSpec(arr.shape, lambda i: (0, 0))

        return pl.pallas_call(
            _mlp_kernel,
            out_shape=jax.ShapeDtypeStruct((Bp, d_out_p), x.dtype),
            grid_spec=pltpu.PrefetchScalarGridSpec(
                num_scalar_prefetch=0,
                grid=grid,
                in_specs=[
                    pl.BlockSpec((tb, d_in_p), lambda i: (i, 0)),   # x tile over batch
                    const2d(ws[0]), const2d(bs[0]),
                    const2d(ws[1]), const2d(bs[1]),
                    const2d(ws[2]), const2d(bs[2]),
                    const2d(ws[3]), const2d(bs[3]),
                ],
                out_specs=pl.BlockSpec((tb, d_out_p), lambda i: (i, 0)),
            ),
            compiler_params=pltpu.CompilerParams(
                dimension_semantics=("parallel",)),
        )(xp, ws[0], bs[0], ws[1], bs[1], ws[2], bs[2], ws[3], bs[3])

    try:
        out_p = build(single_buffer_consts=True)
    except Exception:
        # Fallback for JAX versions that reject Buffered(1) on pallas_call inputs.
        out_p = build(single_buffer_consts=False)

    return out_p[:B, :d_out]


def _reference_forward(x, p):
    h = jnp.tanh(x @ p["w1"] + p["b1"])
    h = jnp.tanh(h @ p["w2"] + p["b2"])
    h = jnp.tanh(h @ p["w3"] + p["b3"])
    return jax.nn.sigmoid(h @ p["w4"] + p["b4"])


if __name__ == "__main__":
    # Small shapes consistent with the module's forward: x is (batch, input_size).
    batch, input_size = 8, 16
    hidden1, hidden2, hidden3, output_size = 32, 48, 32, 16

    key = jax.random.PRNGKey(0)
    key, kx = jax.random.split(key)
    x = jax.random.normal(kx, (batch, input_size), dtype=jnp.float32)

    params = init_generator1_params(key, input_size, hidden1, hidden2, hidden3, output_size)
    ref = _reference_forward(x, params)

    # f32 path (exact vs reference).
    prep_f32 = prepare_generator1_params(params, input_size, matmul_dtype=jnp.float32)
    out = jax.block_until_ready(generator1_forward(x, prep_f32))
    assert out.shape == (batch, output_size)
    assert jnp.allclose(out, ref, atol=1e-5, rtol=1e-5), "Pallas kernel mismatch vs reference (f32)"

    # bf16-fed MXU path (v6e/v7x native bf16 MXU); accumulation/activations remain f32.
    prep_bf16 = prepare_generator1_params(params, input_size, matmul_dtype=jnp.bfloat16)
    out_bf16 = jax.block_until_ready(generator1_forward(x, prep_bf16))
    assert out_bf16.shape == (batch, output_size)
    assert jnp.allclose(out_bf16, ref, atol=2e-2, rtol=2e-2), "Pallas kernel mismatch vs reference (bf16)"

    print("KERNEL_OK")
</pallas_src>

<mosaic_0001>
module attributes {stable_mosaic.version = 11 : i64} {
  func.func @_mlp_kernel(%arg0: i32, %arg1: memref<8x128xf32, #tpu.memory_space<vmem>>, %arg2: memref<128x128xf32, #tpu.memory_space<vmem>>, %arg3: memref<1x128xf32, #tpu.memory_space<vmem>>, %arg4: memref<128x128xf32, #tpu.memory_space<vmem>>, %arg5: memref<1x128xf32, #tpu.memory_space<vmem>>, %arg6: memref<128x128xf32, #tpu.memory_space<vmem>>, %arg7: memref<1x128xf32, #tpu.memory_space<vmem>>, %arg8: memref<128x128xf32, #tpu.memory_space<vmem>>, %arg9: memref<1x128xf32, #tpu.memory_space<vmem>>, %arg10: memref<8x128xf32, #tpu.memory_space<vmem>>) attributes {dimension_semantics = [#tpu.dimension_semantics<parallel>], iteration_bounds = array<i64: 1>, scalar_prefetch = 0 : i64, scratch_operands = 0 : i64, tpu.core_type = #tpu.core_type<tc>, window_params = [{transform_indices = @transform_0, window_bounds = array<i64: 8, 128>}, {pipeline_mode = #tpu.pipeline_mode<synchronous>, transform_indices = @transform_1, window_bounds = array<i64: 128, 128>}, {pipeline_mode = #tpu.pipeline_mode<synchronous>, transform_indices = @transform_2, window_bounds = array<i64: 1, 128>}, {pipeline_mode = #tpu.pipeline_mode<synchronous>, transform_indices = @transform_3, window_bounds = array<i64: 128, 128>}, {pipeline_mode = #tpu.pipeline_mode<synchronous>, transform_indices = @transform_4, window_bounds = array<i64: 1, 128>}, {pipeline_mode = #tpu.pipeline_mode<synchronous>, transform_indices = @transform_5, window_bounds = array<i64: 128, 128>}, {pipeline_mode = #tpu.pipeline_mode<synchronous>, transform_indices = @transform_6, window_bounds = array<i64: 1, 128>}, {pipeline_mode = #tpu.pipeline_mode<synchronous>, transform_indices = @transform_7, window_bounds = array<i64: 128, 128>}, {pipeline_mode = #tpu.pipeline_mode<synchronous>, transform_indices = @transform_8, window_bounds = array<i64: 1, 128>}, {transform_indices = @transform_9, window_bounds = array<i64: 8, 128>}]} {
    %c0 = arith.constant 0 : index
    %c0_0 = arith.constant 0 : index
    %0 = vector.load %arg1[%c0, %c0_0] : memref<8x128xf32, #tpu.memory_space<vmem>>, vector<8x128xf32>
    %c0_1 = arith.constant 0 : index
    %c0_2 = arith.constant 0 : index
    %1 = vector.load %arg2[%c0_1, %c0_2] : memref<128x128xf32, #tpu.memory_space<vmem>>, vector<128x128xf32>
    %cst = arith.constant dense<0.000000e+00> : vector<8x128xf32>
    %2 = tpu.matmul %0, %1, %cst {dimension_numbers = #tpu.dot_dimension_numbers<[1], [0], [0], [1], [0, 0, 1, 1], [], []>} : vector<8x128xf32>, vector<128x128xf32>, vector<8x128xf32> -> vector<8x128xf32>
    %c0_3 = arith.constant 0 : index
    %c0_4 = arith.constant 0 : index
    %3 = vector.load %arg3[%c0_3, %c0_4] : memref<1x128xf32, #tpu.memory_space<vmem>>, vector<1x128xf32>
    %4 = vector.broadcast %3 : vector<1x128xf32> to vector<8x128xf32>
    %5 = arith.addf %2, %4 : vector<8x128xf32>
    %6 = math.tanh %5 : vector<8x128xf32>
    %c0_5 = arith.constant 0 : index
    %c0_6 = arith.constant 0 : index
    %7 = vector.load %arg4[%c0_5, %c0_6] : memref<128x128xf32, #tpu.memory_space<vmem>>, vector<128x128xf32>
    %cst_7 = arith.constant dense<0.000000e+00> : vector<8x128xf32>
    %8 = tpu.matmul %6, %7, %cst_7 {dimension_numbers = #tpu.dot_dimension_numbers<[1], [0], [0], [1], [0, 0, 1, 1], [], []>} : vector<8x128xf32>, vector<128x128xf32>, vector<8x128xf32> -> vector<8x128xf32>
    %c0_8 = arith.constant 0 : index
    %c0_9 = arith.constant 0 : index
    %9 = vector.load %arg5[%c0_8, %c0_9] : memref<1x128xf32, #tpu.memory_space<vmem>>, vector<1x128xf32>
    %10 = vector.broadcast %9 : vector<1x128xf32> to vector<8x128xf32>
    %11 = arith.addf %8, %10 : vector<8x128xf32>
    %12 = math.tanh %11 : vector<8x128xf32>
    %c0_10 = arith.constant 0 : index
    %c0_11 = arith.constant 0 : index
    %13 = vector.load %arg6[%c0_10, %c0_11] : memref<128x128xf32, #tpu.memory_space<vmem>>, vector<128x128xf32>
    %cst_12 = arith.constant dense<0.000000e+00> : vector<8x128xf32>
    %14 = tpu.matmul %12, %13, %cst_12 {dimension_numbers = #tpu.dot_dimension_numbers<[1], [0], [0], [1], [0, 0, 1, 1], [], []>} : vector<8x128xf32>, vector<128x128xf32>, vector<8x128xf32> -> vector<8x128xf32>
    %c0_13 = arith.constant 0 : index
    %c0_14 = arith.constant 0 : index
    %15 = vector.load %arg7[%c0_13, %c0_14] : memref<1x128xf32, #tpu.memory_space<vmem>>, vector<1x128xf32>
    %16 = vector.broadcast %15 : vector<1x128xf32> to vector<8x128xf32>
    %17 = arith.addf %14, %16 : vector<8x128xf32>
    %18 = math.tanh %17 : vector<8x128xf32>
    %c0_15 = arith.constant 0 : index
    %c0_16 = arith.constant 0 : index
    %19 = vector.load %arg8[%c0_15, %c0_16] : memref<128x128xf32, #tpu.memory_space<vmem>>, vector<128x128xf32>
    %cst_17 = arith.constant dense<0.000000e+00> : vector<8x128xf32>
    %20 = tpu.matmul %18, %19, %cst_17 {dimension_numbers = #tpu.dot_dimension_numbers<[1], [0], [0], [1], [0, 0, 1, 1], [], []>} : vector<8x128xf32>, vector<128x128xf32>, vector<8x128xf32> -> vector<8x128xf32>
    %c0_18 = arith.constant 0 : index
    %c0_19 = arith.constant 0 : index
    %21 = vector.load %arg9[%c0_18, %c0_19] : memref<1x128xf32, #tpu.memory_space<vmem>>, vector<1x128xf32>
    %22 = vector.broadcast %21 : vector<1x128xf32> to vector<8x128xf32>
    %23 = arith.addf %20, %22 : vector<8x128xf32>
    %cst_20 = arith.constant 5.000000e-01 : f32
    %24 = vector.broadcast %cst_20 : f32 to vector<8x128xf32>
    %25 = arith.mulf %24, %23 : vector<8x128xf32>
    %26 = math.tanh %25 : vector<8x128xf32>
    %cst_21 = arith.constant 1.000000e+00 : f32
    %27 = vector.broadcast %cst_21 : f32 to vector<8x128xf32>
    %28 = arith.addf %26, %27 : vector<8x128xf32>
    %cst_22 = arith.constant 5.000000e-01 : f32
    %29 = vector.broadcast %cst_22 : f32 to vector<8x128xf32>
    %30 = arith.mulf %29, %28 : vector<8x128xf32>
    %c0_23 = arith.constant 0 : index
    %c0_24 = arith.constant 0 : index
    %31 = vector.load %arg10[%c0_23, %c0_24] : memref<8x128xf32, #tpu.memory_space<vmem>>, vector<8x128xf32>
    tpu.vector_store %arg10[%c0_23, %c0_24], %30 {strides = array<i32>} : memref<8x128xf32, #tpu.memory_space<vmem>>, vector<8x128xf32>,
    return
  }
  func.func @transform_0(%arg0: i32) -> (i32, i32) {
    %c0_i32 = arith.constant 0 : i32
    %c0_i32_0 = arith.constant 0 : i32
    return %arg0, %c0_i32 : i32, i32
  }
  func.func @transform_1(%arg0: i32) -> (i32, i32) {
    %c0_i32 = arith.constant 0 : i32
    %c0_i32_0 = arith.constant 0 : i32
    %c0_i32_1 = arith.constant 0 : i32
    return %c0_i32, %c0_i32_0 : i32, i32
  }
  func.func @transform_2(%arg0: i32) -> (i32, i32) {
    %c0_i32 = arith.constant 0 : i32
    %c0_i32_0 = arith.constant 0 : i32
    %c0_i32_1 = arith.constant 0 : i32
    return %c0_i32, %c0_i32_0 : i32, i32
  }
  func.func @transform_3(%arg0: i32) -> (i32, i32) {
    %c0_i32 = arith.constant 0 : i32
    %c0_i32_0 = arith.constant 0 : i32
    %c0_i32_1 = arith.constant 0 : i32
    return %c0_i32, %c0_i32_0 : i32, i32
  }
  func.func @transform_4(%arg0: i32) -> (i32, i32) {
    %c0_i32 = arith.constant 0 : i32
    %c0_i32_0 = arith.constant 0 : i32
    %c0_i32_1 = arith.constant 0 : i32
    return %c0_i32, %c0_i32_0 : i32, i32
  }
  func.func @transform_5(%arg0: i32) -> (i32, i32) {
    %c0_i32 = arith.constant 0 : i32
    %c0_i32_0 = arith.constant 0 : i32
    %c0_i32_1 = arith.constant 0 : i32
    return %c0_i32, %c0_i32_0 : i32, i32
  }
  func.func @transform_6(%arg0: i32) -> (i32, i32) {
    %c0_i32 = arith.constant 0 : i32
    %c0_i32_0 = arith.constant 0 : i32
    %c0_i32_1 = arith.constant 0 : i32
    return %c0_i32, %c0_i32_0 : i32, i32
  }
  func.func @transform_7(%arg0: i32) -> (i32, i32) {
    %c0_i32 = arith.constant 0 : i32
    %c0_i32_0 = arith.constant 0 : i32
    %c0_i32_1 = arith.constant 0 : i32
    return %c0_i32, %c0_i32_0 : i32, i32
  }
  func.func @transform_8(%arg0: i32) -> (i32, i32) {
    %c0_i32 = arith.constant 0 : i32
    %c0_i32_0 = arith.constant 0 : i32
    %c0_i32_1 = arith.constant 0 : i32
    return %c0_i32, %c0_i32_0 : i32, i32
  }
  func.func @transform_9(%arg0: i32) -> (i32, i32) {
    %c0_i32 = arith.constant 0 : i32
    %c0_i32_0 = arith.constant 0 : i32
    return %arg0, %c0_i32 : i32, i32
  }
}

module attributes {stable_mosaic.version = 11 : i64} {
  func.func @_mlp_kernel(%arg0: i32, %arg1: memref<8x128xf32, #tpu.memory_space<vmem>>, %arg2: memref<128x128xf32, #tpu.memory_space<vmem>>, %arg3: memref<1x128xf32, #tpu.memory_space<vmem>>, %arg4: memref<128x128xf32, #tpu.memory_space<vmem>>, %arg5: memref<1x128xf32, #tpu.memory_space<vmem>>, %arg6: memref<128x128xf32, #tpu.memory_space<vmem>>, %arg7: memref<1x128xf32, #tpu.memory_space<vmem>>, %arg8: memref<128x128xf32, #tpu.memory_space<vmem>>, %arg9: memref<1x128xf32, #tpu.memory_space<vmem>>, %arg10: memref<8x128xf32, #tpu.memory_space<vmem>>) attributes {dimension_semantics = [#tpu.dimension_semantics<parallel>], iteration_bounds = array<i64: 1>, scalar_prefetch = 0 : i64, scratch_operands = 0 : i64, tpu.core_type = #tpu.core_type<tc>, window_params = [{transform_indices = @transform_0, window_bounds = array<i64: 8, 128>}, {pipeline_mode = #tpu.pipeline_mode<synchronous>, transform_indices = @transform_1, window_bounds = array<i64: 128, 128>}, {pipeline_mode = #tpu.pipeline_mode<synchronous>, transform_indices = @transform_2, window_bounds = array<i64: 1, 128>}, {pipeline_mode = #tpu.pipeline_mode<synchronous>, transform_indices = @transform_3, window_bounds = array<i64: 128, 128>}, {pipeline_mode = #tpu.pipeline_mode<synchronous>, transform_indices = @transform_4, window_bounds = array<i64: 1, 128>}, {pipeline_mode = #tpu.pipeline_mode<synchronous>, transform_indices = @transform_5, window_bounds = array<i64: 128, 128>}, {pipeline_mode = #tpu.pipeline_mode<synchronous>, transform_indices = @transform_6, window_bounds = array<i64: 1, 128>}, {pipeline_mode = #tpu.pipeline_mode<synchronous>, transform_indices = @transform_7, window_bounds = array<i64: 128, 128>}, {pipeline_mode = #tpu.pipeline_mode<synchronous>, transform_indices = @transform_8, window_bounds = array<i64: 1, 128>}, {transform_indices = @transform_9, window_bounds = array<i64: 8, 128>}]} {
    %c0 = arith.constant 0 : index
    %c0_0 = arith.constant 0 : index
    %0 = vector.load %arg1[%c0, %c0_0] : memref<8x128xf32, #tpu.memory_space<vmem>>, vector<8x128xf32>
    %c0_1 = arith.constant 0 : index
    %c0_2 = arith.constant 0 : index
    %1 = vector.load %arg2[%c0_1, %c0_2] : memref<128x128xf32, #tpu.memory_space<vmem>>, vector<128x128xf32>
    %cst = arith.constant dense<0.000000e+00> : vector<8x128xf32>
    %2 = tpu.matmul %0, %1, %cst {dimension_numbers = #tpu.dot_dimension_numbers<[1], [0], [0], [1], [0, 0, 1, 1], [], []>} : vector<8x128xf32>, vector<128x128xf32>, vector<8x128xf32> -> vector<8x128xf32>
    %c0_3 = arith.constant 0 : index
    %c0_4 = arith.constant 0 : index
    %3 = vector.load %arg3[%c0_3, %c0_4] : memref<1x128xf32, #tpu.memory_space<vmem>>, vector<1x128xf32>
    %4 = vector.broadcast %3 : vector<1x128xf32> to vector<8x128xf32>
    %5 = arith.addf %2, %4 : vector<8x128xf32>
    %6 = math.tanh %5 : vector<8x128xf32>
    %c0_5 = arith.constant 0 : index
    %c0_6 = arith.constant 0 : index
    %7 = vector.load %arg4[%c0_5, %c0_6] : memref<128x128xf32, #tpu.memory_space<vmem>>, vector<128x128xf32>
    %cst_7 = arith.constant dense<0.000000e+00> : vector<8x128xf32>
    %8 = tpu.matmul %6, %7, %cst_7 {dimension_numbers = #tpu.dot_dimension_numbers<[1], [0], [0], [1], [0, 0, 1, 1], [], []>} : vector<8x128xf32>, vector<128x128xf32>, vector<8x128xf32> -> vector<8x128xf32>
    %c0_8 = arith.constant 0 : index
    %c0_9 = arith.constant 0 : index
    %9 = vector.load %arg5[%c0_8, %c0_9] : memref<1x128xf32, #tpu.memory_space<vmem>>, vector<1x128xf32>
    %10 = vector.broadcast %9 : vector<1x128xf32> to vector<8x128xf32>
    %11 = arith.addf %8, %10 : vector<8x128xf32>
    %12 = math.tanh %11 : vector<8x128xf32>
    %c0_10 = arith.constant 0 : index
    %c0_11 = arith.constant 0 : index
    %13 = vector.load %arg6[%c0_10, %c0_11] : memref<128x128xf32, #tpu.memory_space<vmem>>, vector<128x128xf32>
    %cst_12 = arith.constant dense<0.000000e+00> : vector<8x128xf32>
    %14 = tpu.matmul %12, %13, %cst_12 {dimension_numbers = #tpu.dot_dimension_numbers<[1], [0], [0], [1], [0, 0, 1, 1], [], []>} : vector<8x128xf32>, vector<128x128xf32>, vector<8x128xf32> -> vector<8x128xf32>
    %c0_13 = arith.constant 0 : index
    %c0_14 = arith.constant 0 : index
    %15 = vector.load %arg7[%c0_13, %c0_14] : memref<1x128xf32, #tpu.memory_space<vmem>>, vector<1x128xf32>
    %16 = vector.broadcast %15 : vector<1x128xf32> to vector<8x128xf32>
    %17 = arith.addf %14, %16 : vector<8x128xf32>
    %18 = math.tanh %17 : vector<8x128xf32>
    %c0_15 = arith.constant 0 : index
    %c0_16 = arith.constant 0 : index
    %19 = vector.load %arg8[%c0_15, %c0_16] : memref<128x128xf32, #tpu.memory_space<vmem>>, vector<128x128xf32>
    %cst_17 = arith.constant dense<0.000000e+00> : vector<8x128xf32>
    %20 = tpu.matmul %18, %19, %cst_17 {dimension_numbers = #tpu.dot_dimension_numbers<[1], [0], [0], [1], [0, 0, 1, 1], [], []>} : vector<8x128xf32>, vector<128x128xf32>, vector<8x128xf32> -> vector<8x128xf32>
    %c0_18 = arith.constant 0 : index
    %c0_19 = arith.constant 0 : index
    %21 = vector.load %arg9[%c0_18, %c0_19] : memref<1x128xf32, #tpu.memory_space<vmem>>, vector<1x128xf32>
    %22 = vector.broadcast %21 : vector<1x128xf32> to vector<8x128xf32>
    %23 = arith.addf %20, %22 : vector<8x128xf32>
    %cst_20 = arith.constant 5.000000e-01 : f32
    %24 = vector.broadcast %cst_20 : f32 to vector<8x128xf32>
    %25 = arith.mulf %24, %23 : vector<8x128xf32>
    %26 = math.tanh %25 : vector<8x128xf32>
    %cst_21 = arith.constant 1.000000e+00 : f32
    %27 = vector.broadcast %cst_21 : f32 to vector<8x128xf32>
    %28 = arith.addf %26, %27 : vector<8x128xf32>
    %cst_22 = arith.constant 5.000000e-01 : f32
    %29 = vector.broadcast %cst_22 : f32 to vector<8x128xf32>
    %30 = arith.mulf %29, %28 : vector<8x128xf32>
    %c0_23 = arith.constant 0 : index
    %c0_24 = arith.constant 0 : index
    %31 = vector.load %arg10[%c0_23, %c0_24] : memref<8x128xf32, #tpu.memory_space<vmem>>, vector<8x128xf32>
    tpu.vector_store %arg10[%c0_23, %c0_24], %30 {strides = array<i32>} : memref<8x128xf32, #tpu.memory_space<vmem>>, vector<8x128xf32>,
    return
  }
  func.func @transform_0(%arg0: i32) -> (i32, i32) {
    %c0_i32 = arith.constant 0 : i32
    %c0_i32_0 = arith.constant 0 : i32
    return %arg0, %c0_i32 : i32, i32
  }
  func.func @transform_1(%arg0: i32) -> (i32, i32) {
    %c0_i32 = arith.constant 0 : i32
    %c0_i32_0 = arith.constant 0 : i32
    %c0_i32_1 = arith.constant 0 : i32
    return %c0_i32, %c0_i32_0 : i32, i32
  }
  func.func @transform_2(%arg0: i32) -> (i32, i32) {
    %c0_i32 = arith.constant 0 : i32
    %c0_i32_0 = arith.constant 0 : i32
    %c0_i32_1 = arith.constant 0 : i32
    return %c0_i32, %c0_i32_0 : i32, i32
  }
  func.func @transform_3(%arg0: i32) -> (i32, i32) {
    %c0_i32 = arith.constant 0 : i32
    %c0_i32_0 = arith.constant 0 : i32
    %c0_i32_1 = arith.constant 0 : i32
    return %c0_i32, %c0_i32_0 : i32, i32
  }
  func.func @transform_4(%arg0: i32) -> (i32, i32) {
    %c0_i32 = arith.constant 0 : i32
    %c0_i32_0 = arith.constant 0 : i32
    %c0_i32_1 = arith.constant 0 : i32
    return %c0_i32, %c0_i32_0 : i32, i32
  }
  func.func @transform_5(%arg0: i32) -> (i32, i32) {
    %c0_i32 = arith.constant 0 : i32
    %c0_i32_0 = arith.constant 0 : i32
    %c0_i32_1 = arith.constant 0 : i32
    return %c0_i32, %c0_i32_0 : i32, i32
  }
  func.func @transform_6(%arg0: i32) -> (i32, i32) {
    %c0_i32 = arith.constant 0 : i32
    %c0_i32_0 = arith.constant 0 : i32
    %c0_i32_1 = arith.constant 0 : i32
    return %c0_i32, %c0_i32_0 : i32, i32
  }
  func.func @transform_7(%arg0: i32) -> (i32, i32) {
    %c0_i32 = arith.constant 0 : i32
    %c0_i32_0 = arith.constant 0 : i32
    %c0_i32_1 = arith.constant 0 : i32
    return %c0_i32, %c0_i32_0 : i32, i32
  }
  func.func @transform_8(%arg0: i32) -> (i32, i32) {
    %c0_i32 = arith.constant 0 : i32
    %c0_i32_0 = arith.constant 0 : i32
    %c0_i32_1 = arith.constant 0 : i32
    return %c0_i32, %c0_i32_0 : i32, i32
  }
  func.func @transform_9(%arg0: i32) -> (i32, i32) {
    %c0_i32 = arith.constant 0 : i32
    %c0_i32_0 = arith.constant 0 : i32
    return %arg0, %c0_i32 : i32, i32
  }
}

</mosaic_0001>

<llo_original>
// kernel: tpu_custom_call.1
$region0: #{tpu_custom_call.1}
  #allocation0 [shape = 'u32[]', space=smem, size = 0x4, offset = 0x4, fixed_abs, tag = 'smem constant byte address 0x4 - core index']
  #allocation1 [shape = 'u32[144,128]{1,0:T(1,128)}', space=vmem, size = 0x12000, scoped, tag = 'internal scratch']
  %s0 = inlined_call_operand.hbm [shape: f32[8,128], index: 0, kind: input, shape index: {}]
  %s1 = inlined_call_operand.hbm [shape: f32[128,128], index: 1, kind: input, shape index: {}]
  %s2 = inlined_call_operand.vmem [shape: f32[1,128], index: 2, kind: input, shape index: {}]
  %s3 = inlined_call_operand.hbm [shape: f32[128,128], index: 3, kind: input, shape index: {}]
  %s4 = inlined_call_operand.vmem [shape: f32[1,128], index: 4, kind: input, shape index: {}]
  %s5 = inlined_call_operand.hbm [shape: f32[128,128], index: 5, kind: input, shape index: {}]
  %s6 = inlined_call_operand.vmem [shape: f32[1,128], index: 6, kind: input, shape index: {}]
  %s7 = inlined_call_operand.hbm [shape: f32[128,128], index: 7, kind: input, shape index: {}]
  %s8 = inlined_call_operand.vmem [shape: f32[1,128], index: 8, kind: input, shape index: {}]
  %s9 = inlined_call_operand.hbm [shape: f32[8,128], index: 9, kind: output, shape index: {}]
  %s10 = sld [smem:[#allocation0]]
  $region66: #{tpu_custom_call.1} parent=0
    _
  %s12 = ssub.s32 1, %s10
  %s13 = scalar_select 0, %s12, %s10
  $region1: #{tpu_custom_call.1} parent=0
    #allocation2 [shape = 'u8[4096]{0}', space=vmem, size = 0x1000, scoped, tag = 'input window, operand 0, single buffered']
    #allocation3 [shape = 's32[1]{0}', space=sflag, size = 0x4, scoped, tag = 'scoped memory for tpu_custom_call.1']
    #allocation4 [shape = 's32[1]{0}', space=sflag, size = 0x4, scoped, tag = 'scoped memory for tpu_custom_call.1']
    #allocation5 [shape = 'u8[65536]{0}', space=vmem, size = 0x10000, scoped, tag = 'input window, operand 1, single buffered']
    #allocation6 [shape = 's32[1]{0}', space=sflag, size = 0x4, scoped, tag = 'scoped memory for tpu_custom_call.1']
    #allocation7 [shape = 'u8[65536]{0}', space=vmem, size = 0x10000, scoped, tag = 'input window, operand 3, single buffered']
    #allocation8 [shape = 'u8[65536]{0}', space=vmem, size = 0x10000, scoped, tag = 'input window, operand 5, single buffered']
    #allocation9 [shape = 's32[1]{0}', space=sflag, size = 0x4, scoped, tag = 'scoped memory for tpu_custom_call.1']
    #allocation10 [shape = 'u8[65536]{0}', space=vmem, size = 0x10000, scoped, tag = 'input window, operand 7, single buffered']
    #allocation11 [shape = 'u8[4096]{0}', space=vmem, size = 0x1000, scoped, tag = 'output window, operand 0, single buffered']
    %14 = vsyncpa [#allocation3], 0
    %15 = vsyncpa [#allocation6], 0
    %16 = vsyncpa [#allocation9], 0
    %17 = vsyncpa [#allocation4], 0
    // Predicated region
    $region2: #{tpu_custom_call.1} parent=1 // pred_check
      _
    $region3: #{tpu_custom_call.1} parent=1 // pred_check_branch
      %19 = sbr.rel (0) target = $region5
    $region4: #{tpu_custom_call.1} parent=1 // pred_region
      %s21 = ssub.s32 128, 128
      %22 = vsyncadd [#allocation3], %s21
      %s24 = sshll.u32 [#allocation2], 4
      %s25 = int_to_ptr.vmem [resolvable:$true] %s24
      %27 = dma.hbm_to_vmem [thread:$0]  %s0, 128, %s25, [#allocation3]
    $region5: #{tpu_custom_call.1} parent=1 // pred_fallthru
      _
    // Predicated region
    $region6: #{tpu_custom_call.1} parent=1 // pred_check
      _
    $region7: #{tpu_custom_call.1} parent=1 // pred_check_branch
      %29 = sbr.rel (0) target = $region9
    $region8: #{tpu_custom_call.1} parent=1 // pred_region
      %s31 = ssub.s32 2048, 2048
      %32 = vsyncadd [#allocation6], %s31
      %s33 = sshll.u32 [#allocation5], 4
      %s34 = int_to_ptr.vmem [resolvable:$true] %s33
      %39 = dma.hbm_to_vmem [thread:$0]  %s1, 2048, %s34, [#allocation6], 128, 128, 8
    $region9: #{tpu_custom_call.1} parent=1 // pred_fallthru
      _
    // Predicated region
    $region10: #{tpu_custom_call.1} parent=1 // pred_check
      _
    $region11: #{tpu_custom_call.1} parent=1 // pred_check_branch
      %41 = sbr.rel (0) target = $region13
    $region12: #{tpu_custom_call.1} parent=1 // pred_region
      _
    $region13: #{tpu_custom_call.1} parent=1 // pred_fallthru
      _
    // Predicated region
    $region14: #{tpu_custom_call.1} parent=1 // pred_check
      _
    $region15: #{tpu_custom_call.1} parent=1 // pred_check_branch
      %43 = sbr.rel (0) target = $region17
    $region16: #{tpu_custom_call.1} parent=1 // pred_region
      %s45 = ssub.s32 2048, 2048
      %46 = vsyncadd [#allocation6], %s45
      %s47 = sshll.u32 [#allocation7], 4
      %s48 = int_to_ptr.vmem [resolvable:$true] %s47
      %53 = dma.hbm_to_vmem [thread:$0]  %s3, 2048, %s48, [#allocation6], 128, 128, 8
    $region17: #{tpu_custom_call.1} parent=1 // pred_fallthru
      _
    // Predicated region
    $region18: #{tpu_custom_call.1} parent=1 // pred_check
      _
    $region19: #{tpu_custom_call.1} parent=1 // pred_check_branch
      %55 = sbr.rel (0) target = $region21
    $region20: #{tpu_custom_call.1} parent=1 // pred_region
      _
    $region21: #{tpu_custom_call.1} parent=1 // pred_fallthru
      _
    // Predicated region
    $region22: #{tpu_custom_call.1} parent=1 // pred_check
      _
    $region23: #{tpu_custom_call.1} parent=1 // pred_check_branch
      %57 = sbr.rel (0) target = $region25
    $region24: #{tpu_custom_call.1} parent=1 // pred_region
      %s59 = ssub.s32 2048, 2048
      %60 = vsyncadd [#allocation9], %s59
      %s61 = sshll.u32 [#allocation8], 4
      %s62 = int_to_ptr.vmem [resolvable:$true] %s61
      %67 = dma.hbm_to_vmem [thread:$0]  %s5, 2048, %s62, [#allocation9], 128, 128, 8
    $region25: #{tpu_custom_call.1} parent=1 // pred_fallthru
      _
    // Predicated region
    $region26: #{tpu_custom_call.1} parent=1 // pred_check
      _
    $region27: #{tpu_custom_call.1} parent=1 // pred_check_branch
      %69 = sbr.rel (0) target = $region29
    $region28: #{tpu_custom_call.1} parent=1 // pred_region
      _
    $region29: #{tpu_custom_call.1} parent=1 // pred_fallthru
      _
    // Predicated region
    $region30: #{tpu_custom_call.1} parent=1 // pred_check
      _
    $region31: #{tpu_custom_call.1} parent=1 // pred_check_branch
      %71 = sbr.rel (0) target = $region33
    $region32: #{tpu_custom_call.1} parent=1 // pred_region
      %s73 = ssub.s32 2048, 2048
      %74 = vsyncadd [#allocation9], %s73
      %s75 = sshll.u32 [#allocation10], 4
      %s76 = int_to_ptr.vmem [resolvable:$true] %s75
      %81 = dma.hbm_to_vmem [thread:$0]  %s7, 2048, %s76, [#allocation9], 128, 128, 8
    $region33: #{tpu_custom_call.1} parent=1 // pred_fallthru
      _
    // Predicated region
    $region34: #{tpu_custom_call.1} parent=1 // pred_check
      _
    $region35: #{tpu_custom_call.1} parent=1 // pred_check_branch
      %83 = sbr.rel (0) target = $region37
    $region36: #{tpu_custom_call.1} parent=1 // pred_region
      _
    $region37: #{tpu_custom_call.1} parent=1 // pred_fallthru
      _
    // Predicated region
    $region38: #{tpu_custom_call.1} parent=1 // pred_check
      _
    $region39: #{tpu_custom_call.1} parent=1 // pred_check_branch
      %85 = sbr.rel (0) target = $region41
    $region40: #{tpu_custom_call.1} parent=1 // pred_region
      %86 = dma.done [#allocation3], 128
    $region41: #{tpu_custom_call.1} parent=1 // pred_fallthru
      _
    // Predicated region
    $region42: #{tpu_custom_call.1} parent=1 // pred_check
      _
    $region43: #{tpu_custom_call.1} parent=1 // pred_check_branch
      %88 = sbr.rel (0) target = $region45
    $region44: #{tpu_custom_call.1} parent=1 // pred_region
      %89 = dma.done [#allocation6], 2048
    $region45: #{tpu_custom_call.1} parent=1 // pred_fallthru
      _
    // Predicated region
    $region46: #{tpu_custom_call.1} parent=1 // pred_check
      _
    $region47: #{tpu_custom_call.1} parent=1 // pred_check_branch
      %91 = sbr.rel (0) target = $region49
    $region48: #{tpu_custom_call.1} parent=1 // pred_region
      %92 = dma.done [#allocation6], 2048
    $region49: #{tpu_custom_call.1} parent=1 // pred_fallthru
      _
    // Predicated region
    $region50: #{tpu_custom_call.1} parent=1 // pred_check
      _
    $region51: #{tpu_custom_call.1} parent=1 // pred_check_branch
      %94 = sbr.rel (0) target = $region53
    $region52: #{tpu_custom_call.1} parent=1 // pred_region
      %95 = dma.done [#allocation9], 2048
    $region53: #{tpu_custom_call.1} parent=1 // pred_fallthru
      _
    // Predicated region
    $region54: #{tpu_custom_call.1} parent=1 // pred_check
      _
    $region55: #{tpu_custom_call.1} parent=1 // pred_check_branch
      %97 = sbr.rel (0) target = $region57
    $region56: #{tpu_custom_call.1} parent=1 // pred_region
      %98 = dma.done [#allocation9], 2048
    $region57: #{tpu_custom_call.1} parent=1 // pred_fallthru
      _
    %v99 = vld [vmem:[#allocation2] sm:$0xff]
    %v100 = vld [vmem:[#allocation5] sm:$0xff]
    %v101 = vld [vmem:[#allocation5 + $0x8] sm:$0xff]
    %v102 = vld [vmem:[#allocation5 + $0x10] sm:$0xff]
    %v103 = vld [vmem:[#allocation5 + $0x18] sm:$0xff]
    %v104 = vld [vmem:[#allocation5 + $0x20] sm:$0xff]
    %v105 = vld [vmem:[#allocation5 + $0x28] sm:$0xff]
    %v106 = vld [vmem:[#allocation5 + $0x30] sm:$0xff]
    %v107 = vld [vmem:[#allocation5 + $0x38] sm:$0xff]
    %v108 = vld [vmem:[#allocation5 + $0x40] sm:$0xff]
    %v109 = vld [vmem:[#allocation5 + $0x48] sm:$0xff]
    %v110 = vld [vmem:[#allocation5 + $0x50] sm:$0xff]
    %v111 = vld [vmem:[#allocation5 + $0x58] sm:$0xff]
    %v112 = vld [vmem:[#allocation5 + $0x60] sm:$0xff]
    %v113 = vld [vmem:[#allocation5 + $0x68] sm:$0xff]
    %v114 = vld [vmem:[#allocation5 + $0x70] sm:$0xff]
    %v115 = vld [vmem:[#allocation5 + $0x78] sm:$0xff]
    %v116 = vld [vmem:[%s2] sm:$0x1]
    %v118 = vlaneseq
    %v119 = vshrl.u32 %v118, 7
    %v120 = vsub.s32 0, %v119
    %v121 = vrot.slane %v116, %v120
    %123 = vmatprep.subr.mxu0 0.0
    %124 = vmatpush1.msra.mxu0 %v100
    %125 = vmatprep.subr.mxu0 0.0
    %126 = vmatpush1.msra.mxu0 %v101
    %127 = vmatprep.subr.mxu0 0.0
    %128 = vmatpush1.msra.mxu0 %v102
    %129 = vmatprep.subr.mxu0 0.0
    %130 = vmatpush1.msra.mxu0 %v103
    %131 = vmatprep.subr.mxu0 0.0
    %132 = vmatpush1.msra.mxu0 %v104
    %133 = vmatprep.subr.mxu0 0.0
    %134 = vmatpush1.msra.mxu0 %v105
    %135 = vmatprep.subr.mxu0 0.0
    %136 = vmatpush1.msra.mxu0 %v106
    %137 = vmatprep.subr.mxu0 0.0
    %138 = vmatpush1.msra.mxu0 %v107
    %139 = vmatprep.subr.mxu0 0.0
    %140 = vmatpush1.msra.mxu0 %v108
    %141 = vmatprep.subr.mxu0 0.0
    %142 = vmatpush1.msra.mxu0 %v109
    %143 = vmatprep.subr.mxu0 0.0
    %144 = vmatpush1.msra.mxu0 %v110
    %145 = vmatprep.subr.mxu0 0.0
    %146 = vmatpush1.msra.mxu0 %v111
    %147 = vmatprep.subr.mxu0 0.0
    %148 = vmatpush1.msra.mxu0 %v112
    %149 = vmatprep.subr.mxu0 0.0
    %150 = vmatpush1.msra.mxu0 %v113
    %151 = vmatprep.subr.mxu0 0.0
    %152 = vmatpush1.msra.mxu0 %v114
    %153 = vmatprep.subr.mxu0 0.0
    %154 = vmatpush1.msra.mxu0 %v115
    %155 = vmatprep.subr.mxu0 0.0
    %156 = vmatpush1.msra.mxu0 0.0
    %157 = vmatprep.subr.mxu0 0.0
    %158 = vmatpush1.msra.mxu0 0.0
    %159 = vmatprep.subr.mxu0 0.0
    %160 = vmatpush1.msra.mxu0 0.0
    %161 = vmatprep.subr.mxu0 0.0
    %162 = vmatpush1.msra.mxu0 0.0
    %163 = vmatprep.subr.mxu0 0.0
    %164 = vmatpush1.msra.mxu0 0.0
    %165 = vmatprep.subr.mxu0 0.0
    %166 = vmatpush1.msra.mxu0 0.0
    %167 = vmatprep.subr.mxu0 0.0
    %168 = vmatpush1.msra.mxu0 0.0
    %169 = vmatprep.subr.mxu0 0.0
    %170 = vmatpush1.msra.mxu0 0.0
    %171 = vmatprep.subr.mxu0 0.0
    %172 = vmatpush1.msra.mxu0 0.0
    %173 = vmatprep.subr.mxu0 0.0
    %174 = vmatpush1.msra.mxu0 0.0
    %175 = vmatprep.subr.mxu0 0.0
    %176 = vmatpush1.msra.mxu0 0.0
    %177 = vmatprep.subr.mxu0 0.0
    %178 = vmatpush1.msra.mxu0 0.0
    %179 = vmatprep.subr.mxu0 0.0
    %180 = vmatpush1.msra.mxu0 0.0
    %181 = vmatprep.subr.mxu0 0.0
    %182 = vmatpush1.msra.mxu0 0.0
    %183 = vmatprep.subr.mxu0 0.0
    %184 = vmatpush1.msra.mxu0 0.0
    %185 = vmatprep.subr.mxu0 0.0
    %186 = vmatpush1.msra.mxu0 0.0
    %187 = vmatprep.mubr.f32.mxu0 0.0
    %188 = vmatmul.mubr.f32.gmra.mrb[0].mxu0 %v99
    %v189 = vpop.f32.mrb[0].mxu0
    %v190 = vadd.f32 %v121, %v189
    %v191 = vpop.f32.mrb[0].mxu0
    %192 = vdwg.mxu0
    %v193 = vtanh.pop %v190
    %v194 = vld [vmem:[#allocation7] sm:$0xff]
    %v195 = vld [vmem:[#allocation7 + $0x8] sm:$0xff]
    %v196 = vld [vmem:[#allocation7 + $0x10] sm:$0xff]
    %v197 = vld [vmem:[#allocation7 + $0x18] sm:$0xff]
    %v198 = vld [vmem:[#allocation7 + $0x20] sm:$0xff]
    %v199 = vld [vmem:[#allocation7 + $0x28] sm:$0xff]
    %v200 = vld [vmem:[#allocation7 + $0x30] sm:$0xff]
    %v201 = vld [vmem:[#allocation7 + $0x38] sm:$0xff]
    %v202 = vld [vmem:[#allocation7 + $0x40] sm:$0xff]
    %v203 = vld [vmem:[#allocation7 + $0x48] sm:$0xff]
    %v204 = vld [vmem:[#allocation7 + $0x50] sm:$0xff]
    %v205 = vld [vmem:[#allocation7 + $0x58] sm:$0xff]
    %v206 = vld [vmem:[#allocation7 + $0x60] sm:$0xff]
    %v207 = vld [vmem:[#allocation7 + $0x68] sm:$0xff]
    %v208 = vld [vmem:[#allocation7 + $0x70] sm:$0xff]
    %v209 = vld [vmem:[#allocation7 + $0x78] sm:$0xff]
    %v210 = vld [vmem:[%s4] sm:$0x1]
    %v212 = vlaneseq
    %v213 = vshrl.u32 %v212, 7
    %v214 = vsub.s32 0, %v213
    %v215 = vrot.slane %v210, %v214
    %217 = vmatprep.subr.mxu0 0.0
    %218 = vmatpush1.msra.mxu0 %v194
    %219 = vmatprep.subr.mxu0 0.0
    %220 = vmatpush1.msra.mxu0 %v195
    %221 = vmatprep.subr.mxu0 0.0
    %222 = vmatpush1.msra.mxu0 %v196
    %223 = vmatprep.subr.mxu0 0.0
    %224 = vmatpush1.msra.mxu0 %v197
    %225 = vmatprep.subr.mxu0 0.0
    %226 = vmatpush1.msra.mxu0 %v198
    %227 = vmatprep.subr.mxu0 0.0
    %228 = vmatpush1.msra.mxu0 %v199
    %229 = vmatprep.subr.mxu0 0.0
    %230 = vmatpush1.msra.mxu0 %v200
    %231 = vmatprep.subr.mxu0 0.0
    %232 = vmatpush1.msra.mxu0 %v201
    %233 = vmatprep.subr.mxu0 0.0
    %234 = vmatpush1.msra.mxu0 %v202
    %235 = vmatprep.subr.mxu0 0.0
    %236 = vmatpush1.msra.mxu0 %v203
    %237 = vmatprep.subr.mxu0 0.0
    %238 = vmatpush1.msra.mxu0 %v204
    %239 = vmatprep.subr.mxu0 0.0
    %240 = vmatpush1.msra.mxu0 %v205
    %241 = vmatprep.subr.mxu0 0.0
    %242 = vmatpush1.msra.mxu0 %v206
    %243 = vmatprep.subr.mxu0 0.0
    %244 = vmatpush1.msra.mxu0 %v207
    %245 = vmatprep.subr.mxu0 0.0
    %246 = vmatpush1.msra.mxu0 %v208
    %247 = vmatprep.subr.mxu0 0.0
    %248 = vmatpush1.msra.mxu0 %v209
    %249 = vmatprep.subr.mxu0 0.0
    %250 = vmatpush1.msra.mxu0 0.0
    %251 = vmatprep.subr.mxu0 0.0
    %252 = vmatpush1.msra.mxu0 0.0
    %253 = vmatprep.subr.mxu0 0.0
    %254 = vmatpush1.msra.mxu0 0.0
    %255 = vmatprep.subr.mxu0 0.0
    %256 = vmatpush1.msra.mxu0 0.0
    %257 = vmatprep.subr.mxu0 0.0
    %258 = vmatpush1.msra.mxu0 0.0
    %259 = vmatprep.subr.mxu0 0.0
    %260 = vmatpush1.msra.mxu0 0.0
    %261 = vmatprep.subr.mxu0 0.0
    %262 = vmatpush1.msra.mxu0 0.0
    %263 = vmatprep.subr.mxu0 0.0
    %264 = vmatpush1.msra.mxu0 0.0
    %265 = vmatprep.subr.mxu0 0.0
    %266 = vmatpush1.msra.mxu0 0.0
    %267 = vmatprep.subr.mxu0 0.0
    %268 = vmatpush1.msra.mxu0 0.0
    %269 = vmatprep.subr.mxu0 0.0
    %270 = vmatpush1.msra.mxu0 0.0
    %271 = vmatprep.subr.mxu0 0.0
    %272 = vmatpush1.msra.mxu0 0.0
    %273 = vmatprep.subr.mxu0 0.0
    %274 = vmatpush1.msra.mxu0 0.0
    %275 = vmatprep.subr.mxu0 0.0
    %276 = vmatpush1.msra.mxu0 0.0
    %277 = vmatprep.subr.mxu0 0.0
    %278 = vmatpush1.msra.mxu0 0.0
    %279 = vmatprep.subr.mxu0 0.0
    %280 = vmatpush1.msra.mxu0 0.0
    %281 = vmatprep.mubr.f32.mxu0 0.0
    %282 = vmatmul.mubr.f32.gmra.mrb[0].mxu0 %v193
    %v283 = vpop.f32.mrb[0].mxu0
    %v284 = vadd.f32 %v215, %v283
    %v285 = vpop.f32.mrb[0].mxu0
    %286 = vdwg.mxu0
    %v287 = vtanh.pop %v284
    %v288 = vld [vmem:[#allocation8] sm:$0xff]
    %v289 = vld [vmem:[#allocation8 + $0x8] sm:$0xff]
    %v290 = vld [vmem:[#allocation8 + $0x10] sm:$0xff]
    %v291 = vld [vmem:[#allocation8 + $0x18] sm:$0xff]
    %v292 = vld [vmem:[#allocation8 + $0x20] sm:$0xff]
    %v293 = vld [vmem:[#allocation8 + $0x28] sm:$0xff]
    %v294 = vld [vmem:[#allocation8 + $0x30] sm:$0xff]
    %v295 = vld [vmem:[#allocation8 + $0x38] sm:$0xff]
    %v296 = vld [vmem:[#allocation8 + $0x40] sm:$0xff]
    %v297 = vld [vmem:[#allocation8 + $0x48] sm:$0xff]
    %v298 = vld [vmem:[#allocation8 + $0x50] sm:$0xff]
    %v299 = vld [vmem:[#allocation8 + $0x58] sm:$0xff]
    %v300 = vld [vmem:[#allocation8 + $0x60] sm:$0xff]
    %v301 = vld [vmem:[#allocation8 + $0x68] sm:$0xff]
    %v302 = vld [vmem:[#allocation8 + $0x70] sm:$0xff]
    %v303 = vld [vmem:[#allocation8 + $0x78] sm:$0xff]
    %v304 = vld [vmem:[%s6] sm:$0x1]
    %v306 = vlaneseq
    %v307 = vshrl.u32 %v306, 7
    %v308 = vsub.s32 0, %v307
    %v309 = vrot.slane %v304, %v308
    %311 = vmatprep.subr.mxu0 0.0
    %312 = vmatpush1.msra.mxu0 %v288
    %313 = vmatprep.subr.mxu0 0.0
    %314 = vmatpush1.msra.mxu0 %v289
    %315 = vmatprep.subr.mxu0 0.0
    %316 = vmatpush1.msra.mxu0 %v290
    %317 = vmatprep.subr.mxu0 0.0
    %318 = vmatpush1.msra.mxu0 %v291
    %319 = vmatprep.subr.mxu0 0.0
    %320 = vmatpush1.msra.mxu0 %v292
    %321 = vmatprep.subr.mxu0 0.0
    %322 = vmatpush1.msra.mxu0 %v293
    %323 = vmatprep.subr.mxu0 0.0
    %324 = vmatpush1.msra.mxu0 %v294
    %325 = vmatprep.subr.mxu0 0.0
    %326 = vmatpush1.msra.mxu0 %v295
    %327 = vmatprep.subr.mxu0 0.0
    %328 = vmatpush1.msra.mxu0 %v296
    %329 = vmatprep.subr.mxu0 0.0
    %330 = vmatpush1.msra.mxu0 %v297
    %331 = vmatprep.subr.mxu0 0.0
    %332 = vmatpush1.msra.mxu0 %v298
    %333 = vmatprep.subr.mxu0 0.0
    %334 = vmatpush1.msra.mxu0 %v299
    %335 = vmatprep.subr.mxu0 0.0
    %336 = vmatpush1.msra.mxu0 %v300
    %337 = vmatprep.subr.mxu0 0.0
    %338 = vmatpush1.msra.mxu0 %v301
    %339 = vmatprep.subr.mxu0 0.0
    %340 = vmatpush1.msra.mxu0 %v302
    %341 = vmatprep.subr.mxu0 0.0
    %342 = vmatpush1.msra.mxu0 %v303
    %343 = vmatprep.subr.mxu0 0.0
    %344 = vmatpush1.msra.mxu0 0.0
    %345 = vmatprep.subr.mxu0 0.0
    %346 = vmatpush1.msra.mxu0 0.0
    %347 = vmatprep.subr.mxu0 0.0
    %348 = vmatpush1.msra.mxu0 0.0
    %349 = vmatprep.subr.mxu0 0.0
    %350 = vmatpush1.msra.mxu0 0.0
    %351 = vmatprep.subr.mxu0 0.0
    %352 = vmatpush1.msra.mxu0 0.0
    %353 = vmatprep.subr.mxu0 0.0
    %354 = vmatpush1.msra.mxu0 0.0
    %355 = vmatprep.subr.mxu0 0.0
    %356 = vmatpush1.msra.mxu0 0.0
    %357 = vmatprep.subr.mxu0 0.0
    %358 = vmatpush1.msra.mxu0 0.0
    %359 = vmatprep.subr.mxu0 0.0
    %360 = vmatpush1.msra.mxu0 0.0
    %361 = vmatprep.subr.mxu0 0.0
    %362 = vmatpush1.msra.mxu0 0.0
    %363 = vmatprep.subr.mxu0 0.0
    %364 = vmatpush1.msra.mxu0 0.0
    %365 = vmatprep.subr.mxu0 0.0
    %366 = vmatpush1.msra.mxu0 0.0
    %367 = vmatprep.subr.mxu0 0.0
    %368 = vmatpush1.msra.mxu0 0.0
    %369 = vmatprep.subr.mxu0 0.0
    %370 = vmatpush1.msra.mxu0 0.0
    %371 = vmatprep.subr.mxu0 0.0
    %372 = vmatpush1.msra.mxu0 0.0
    %373 = vmatprep.subr.mxu0 0.0
    %374 = vmatpush1.msra.mxu0 0.0
    %375 = vmatprep.mubr.f32.mxu0 0.0
    %376 = vmatmul.mubr.f32.gmra.mrb[0].mxu0 %v287
    %v377 = vpop.f32.mrb[0].mxu0
    %v378 = vadd.f32 %v309, %v377
    %v379 = vpop.f32.mrb[0].mxu0
    %380 = vdwg.mxu0
    %v381 = vtanh.pop %v378
    %v382 = vld [vmem:[#allocation10] sm:$0xff]
    %v383 = vld [vmem:[#allocation10 + $0x8] sm:$0xff]
    %v384 = vld [vmem:[#allocation10 + $0x10] sm:$0xff]
    %v385 = vld [vmem:[#allocation10 + $0x18] sm:$0xff]
    %v386 = vld [vmem:[#allocation10 + $0x20] sm:$0xff]
    %v387 = vld [vmem:[#allocation10 + $0x28] sm:$0xff]
    %v388 = vld [vmem:[#allocation10 + $0x30] sm:$0xff]
    %v389 = vld [vmem:[#allocation10 + $0x38] sm:$0xff]
    %v390 = vld [vmem:[#allocation10 + $0x40] sm:$0xff]
    %v391 = vld [vmem:[#allocation10 + $0x48] sm:$0xff]
    %v392 = vld [vmem:[#allocation10 + $0x50] sm:$0xff]
    %v393 = vld [vmem:[#allocation10 + $0x58] sm:$0xff]
    %v394 = vld [vmem:[#allocation10 + $0x60] sm:$0xff]
    %v395 = vld [vmem:[#allocation10 + $0x68] sm:$0xff]
    %v396 = vld [vmem:[#allocation10 + $0x70] sm:$0xff]
    %v397 = vld [vmem:[#allocation10 + $0x78] sm:$0xff]
    %v398 = vld [vmem:[%s8] sm:$0x1]
    %v400 = vlaneseq
    %v401 = vshrl.u32 %v400, 7
    %v402 = vsub.s32 0, %v401
    %v403 = vrot.slane %v398, %v402
    %405 = vmatprep.subr.mxu0 0.0
    %406 = vmatpush1.msra.mxu0 %v382
    %407 = vmatprep.subr.mxu0 0.0
    %408 = vmatpush1.msra.mxu0 %v383
    %409 = vmatprep.subr.mxu0 0.0
    %410 = vmatpush1.msra.mxu0 %v384
    %411 = vmatprep.subr.mxu0 0.0
    %412 = vmatpush1.msra.mxu0 %v385
    %413 = vmatprep.subr.mxu0 0.0
    %414 = vmatpush1.msra.mxu0 %v386
    %415 = vmatprep.subr.mxu0 0.0
    %416 = vmatpush1.msra.mxu0 %v387
    %417 = vmatprep.subr.mxu0 0.0
    %418 = vmatpush1.msra.mxu0 %v388
    %419 = vmatprep.subr.mxu0 0.0
    %420 = vmatpush1.msra.mxu0 %v389
    %421 = vmatprep.subr.mxu0 0.0
    %422 = vmatpush1.msra.mxu0 %v390
    %423 = vmatprep.subr.mxu0 0.0
    %424 = vmatpush1.msra.mxu0 %v391
    %425 = vmatprep.subr.mxu0 0.0
    %426 = vmatpush1.msra.mxu0 %v392
    %427 = vmatprep.subr.mxu0 0.0
    %428 = vmatpush1.msra.mxu0 %v393
    %429 = vmatprep.subr.mxu0 0.0
    %430 = vmatpush1.msra.mxu0 %v394
    %431 = vmatprep.subr.mxu0 0.0
    %432 = vmatpush1.msra.mxu0 %v395
    %433 = vmatprep.subr.mxu0 0.0
    %434 = vmatpush1.msra.mxu0 %v396
    %435 = vmatprep.subr.mxu0 0.0
    %436 = vmatpush1.msra.mxu0 %v397
    %437 = vmatprep.subr.mxu0 0.0
    %438 = vmatpush1.msra.mxu0 0.0
    %439 = vmatprep.subr.mxu0 0.0
    %440 = vmatpush1.msra.mxu0 0.0
    %441 = vmatprep.subr.mxu0 0.0
    %442 = vmatpush1.msra.mxu0 0.0
    %443 = vmatprep.subr.mxu0 0.0
    %444 = vmatpush1.msra.mxu0 0.0
    %445 = vmatprep.subr.mxu0 0.0
    %446 = vmatpush1.msra.mxu0 0.0
    %447 = vmatprep.subr.mxu0 0.0
    %448 = vmatpush1.msra.mxu0 0.0
    %449 = vmatprep.subr.mxu0 0.0
    %450 = vmatpush1.msra.mxu0 0.0
    %451 = vmatprep.subr.mxu0 0.0
    %452 = vmatpush1.msra.mxu0 0.0
    %453 = vmatprep.subr.mxu0 0.0
    %454 = vmatpush1.msra.mxu0 0.0
    %455 = vmatprep.subr.mxu0 0.0
    %456 = vmatpush1.msra.mxu0 0.0
    %457 = vmatprep.subr.mxu0 0.0
    %458 = vmatpush1.msra.mxu0 0.0
    %459 = vmatprep.subr.mxu0 0.0
    %460 = vmatpush1.msra.mxu0 0.0
    %461 = vmatprep.subr.mxu0 0.0
    %462 = vmatpush1.msra.mxu0 0.0
    %463 = vmatprep.subr.mxu0 0.0
    %464 = vmatpush1.msra.mxu0 0.0
    %465 = vmatprep.subr.mxu0 0.0
    %466 = vmatpush1.msra.mxu0 0.0
    %467 = vmatprep.subr.mxu0 0.0
    %468 = vmatpush1.msra.mxu0 0.0
    %469 = vmatprep.mubr.f32.mxu0 0.0
    %470 = vmatmul.mubr.f32.gmra.mrb[0].mxu0 %v381
    %v471 = vpop.f32.mrb[0].mxu0
    %v472 = vadd.f32 %v403, %v471
    %v473 = vpop.f32.mrb[0].mxu0
    %474 = vdwg.mxu0
    %v475 = vmul.f32 %v472, 0.5
    %v476 = vtanh.pop %v475
    %v477 = vadd.f32 %v476, 1.0
    %v478 = vmul.f32 %v477, 0.5
    %479 = vst [vmem:[#allocation11] sm:$0xff] %v478
    // Predicated region
    $region58: #{tpu_custom_call.1} parent=1 // pred_check
      _
    $region59: #{tpu_custom_call.1} parent=1 // pred_check_branch
      %481 = sbr.rel (0) target = $region61
    $region60: #{tpu_custom_call.1} parent=1 // pred_region
      %s483 = ssub.s32 128, 128
      %484 = vsyncadd [#allocation4], %s483
      %s486 = sshll.u32 [#allocation11], 4
      %s487 = int_to_ptr.vmem [resolvable:$true] %s486
      %489 = dma.vmem_to_hbm [thread:$0]  %s487, 128, %s9, [#allocation4]
    $region61: #{tpu_custom_call.1} parent=1 // pred_fallthru
      _
    // Predicated region
    $region62: #{tpu_custom_call.1} parent=1 // pred_check
      _
    $region63: #{tpu_custom_call.1} parent=1 // pred_check_branch
      %491 = sbr.rel (0) target = $region65
    $region64: #{tpu_custom_call.1} parent=1 // pred_region
      %492 = dma.done [#allocation4], 128
    $region65: #{tpu_custom_call.1} parent=1 // pred_fallthru
      _
    %493 = vsyncpa [#allocation3], 1
    %494 = vsyncpa [#allocation6], 1
    %495 = vsyncpa [#allocation9], 1
    %496 = vsyncpa [#allocation4], 1

// kernel: tpu_custom_call.1
$region0: #{tpu_custom_call.1}
  #allocation0 [shape = 'u32[]', space=smem, size = 0x4, offset = 0x4, fixed_abs, tag = 'smem constant byte address 0x4 - core index']
  #allocation1 [shape = 'u32[144,128]{1,0:T(1,128)}', space=vmem, size = 0x12000, scoped, tag = 'internal scratch']
  %s0 = inlined_call_operand.hbm [shape: f32[8,128], index: 0, kind: input, shape index: {}]
  %s1 = inlined_call_operand.hbm [shape: f32[128,128], index: 1, kind: input, shape index: {}]
  %s2 = inlined_call_operand.vmem [shape: f32[1,128], index: 2, kind: input, shape index: {}]
  %s3 = inlined_call_operand.hbm [shape: f32[128,128], index: 3, kind: input, shape index: {}]
  %s4 = inlined_call_operand.vmem [shape: f32[1,128], index: 4, kind: input, shape index: {}]
  %s5 = inlined_call_operand.hbm [shape: f32[128,128], index: 5, kind: input, shape index: {}]
  %s6 = inlined_call_operand.vmem [shape: f32[1,128], index: 6, kind: input, shape index: {}]
  %s7 = inlined_call_operand.hbm [shape: f32[128,128], index: 7, kind: input, shape index: {}]
  %s8 = inlined_call_operand.vmem [shape: f32[1,128], index: 8, kind: input, shape index: {}]
  %s9 = inlined_call_operand.hbm [shape: f32[8,128], index: 9, kind: output, shape index: {}]
  %s10 = sld [smem:[#allocation0]]
  $region66: #{tpu_custom_call.1} parent=0
    _
  %s12 = ssub.s32 1, %s10
  %s13 = scalar_select 0, %s12, %s10
  $region1: #{tpu_custom_call.1} parent=0
    #allocation2 [shape = 'u8[4096]{0}', space=vmem, size = 0x1000, scoped, tag = 'input window, operand 0, single buffered']
    #allocation3 [shape = 's32[1]{0}', space=sflag, size = 0x4, scoped, tag = 'scoped memory for tpu_custom_call.1']
    #allocation4 [shape = 's32[1]{0}', space=sflag, size = 0x4, scoped, tag = 'scoped memory for tpu_custom_call.1']
    #allocation5 [shape = 'u8[65536]{0}', space=vmem, size = 0x10000, scoped, tag = 'input window, operand 1, single buffered']
    #allocation6 [shape = 's32[1]{0}', space=sflag, size = 0x4, scoped, tag = 'scoped memory for tpu_custom_call.1']
    #allocation7 [shape = 'u8[65536]{0}', space=vmem, size = 0x10000, scoped, tag = 'input window, operand 3, single buffered']
    #allocation8 [shape = 'u8[65536]{0}', space=vmem, size = 0x10000, scoped, tag = 'input window, operand 5, single buffered']
    #allocation9 [shape = 's32[1]{0}', space=sflag, size = 0x4, scoped, tag = 'scoped memory for tpu_custom_call.1']
    #allocation10 [shape = 'u8[65536]{0}', space=vmem, size = 0x10000, scoped, tag = 'input window, operand 7, single buffered']
    #allocation11 [shape = 'u8[4096]{0}', space=vmem, size = 0x1000, scoped, tag = 'output window, operand 0, single buffered']
    %14 = vsyncpa [#allocation3], 0
    %15 = vsyncpa [#allocation6], 0
    %16 = vsyncpa [#allocation9], 0
    %17 = vsyncpa [#allocation4], 0
    // Predicated region
    $region2: #{tpu_custom_call.1} parent=1 // pred_check
      _
    $region3: #{tpu_custom_call.1} parent=1 // pred_check_branch
      %19 = sbr.rel (0) target = $region5
    $region4: #{tpu_custom_call.1} parent=1 // pred_region
      %s21 = ssub.s32 128, 128
      %22 = vsyncadd [#allocation3], %s21
      %s24 = sshll.u32 [#allocation2], 4
      %s25 = int_to_ptr.vmem [resolvable:$true] %s24
      %27 = dma.hbm_to_vmem [thread:$0]  %s0, 128, %s25, [#allocation3]
    $region5: #{tpu_custom_call.1} parent=1 // pred_fallthru
      _
    // Predicated region
    $region6: #{tpu_custom_call.1} parent=1 // pred_check
      _
    $region7: #{tpu_custom_call.1} parent=1 // pred_check_branch
      %29 = sbr.rel (0) target = $region9
    $region8: #{tpu_custom_call.1} parent=1 // pred_region
      %s31 = ssub.s32 2048, 2048
      %32 = vsyncadd [#allocation6], %s31
      %s33 = sshll.u32 [#allocation5], 4
      %s34 = int_to_ptr.vmem [resolvable:$true] %s33
      %39 = dma.hbm_to_vmem [thread:$0]  %s1, 2048, %s34, [#allocation6], 128, 128, 8
    $region9: #{tpu_custom_call.1} parent=1 // pred_fallthru
      _
    // Predicated region
    $region10: #{tpu_custom_call.1} parent=1 // pred_check
      _
    $region11: #{tpu_custom_call.1} parent=1 // pred_check_branch
      %41 = sbr.rel (0) target = $region13
    $region12: #{tpu_custom_call.1} parent=1 // pred_region
      _
    $region13: #{tpu_custom_call.1} parent=1 // pred_fallthru
      _
    // Predicated region
    $region14: #{tpu_custom_call.1} parent=1 // pred_check
      _
    $region15: #{tpu_custom_call.1} parent=1 // pred_check_branch
      %43 = sbr.rel (0) target = $region17
    $region16: #{tpu_custom_call.1} parent=1 // pred_region
      %s45 = ssub.s32 2048, 2048
      %46 = vsyncadd [#allocation6], %s45
      %s47 = sshll.u32 [#allocation7], 4
      %s48 = int_to_ptr.vmem [resolvable:$true] %s47
      %53 = dma.hbm_to_vmem [thread:$0]  %s3, 2048, %s48, [#allocation6], 128, 128, 8
    $region17: #{tpu_custom_call.1} parent=1 // pred_fallthru
      _
    // Predicated region
    $region18: #{tpu_custom_call.1} parent=1 // pred_check
      _
    $region19: #{tpu_custom_call.1} parent=1 // pred_check_branch
      %55 = sbr.rel (0) target = $region21
    $region20: #{tpu_custom_call.1} parent=1 // pred_region
      _
    $region21: #{tpu_custom_call.1} parent=1 // pred_fallthru
      _
    // Predicated region
    $region22: #{tpu_custom_call.1} parent=1 // pred_check
      _
    $region23: #{tpu_custom_call.1} parent=1 // pred_check_branch
      %57 = sbr.rel (0) target = $region25
    $region24: #{tpu_custom_call.1} parent=1 // pred_region
      %s59 = ssub.s32 2048, 2048
      %60 = vsyncadd [#allocation9], %s59
      %s61 = sshll.u32 [#allocation8], 4
      %s62 = int_to_ptr.vmem [resolvable:$true] %s61
      %67 = dma.hbm_to_vmem [thread:$0]  %s5, 2048, %s62, [#allocation9], 128, 128, 8
    $region25: #{tpu_custom_call.1} parent=1 // pred_fallthru
      _
    // Predicated region
    $region26: #{tpu_custom_call.1} parent=1 // pred_check
      _
    $region27: #{tpu_custom_call.1} parent=1 // pred_check_branch
      %69 = sbr.rel (0) target = $region29
    $region28: #{tpu_custom_call.1} parent=1 // pred_region
      _
    $region29: #{tpu_custom_call.1} parent=1 // pred_fallthru
      _
    // Predicated region
    $region30: #{tpu_custom_call.1} parent=1 // pred_check
      _
    $region31: #{tpu_custom_call.1} parent=1 // pred_check_branch
      %71 = sbr.rel (0) target = $region33
    $region32: #{tpu_custom_call.1} parent=1 // pred_region
      %s73 = ssub.s32 2048, 2048
      %74 = vsyncadd [#allocation9], %s73
      %s75 = sshll.u32 [#allocation10], 4
      %s76 = int_to_ptr.vmem [resolvable:$true] %s75
      %81 = dma.hbm_to_vmem [thread:$0]  %s7, 2048, %s76, [#allocation9], 128, 128, 8
    $region33: #{tpu_custom_call.1} parent=1 // pred_fallthru
      _
    // Predicated region
    $region34: #{tpu_custom_call.1} parent=1 // pred_check
      _
    $region35: #{tpu_custom_call.1} parent=1 // pred_check_branch
      %83 = sbr.rel (0) target = $region37
    $region36: #{tpu_custom_call.1} parent=1 // pred_region
      _
    $region37: #{tpu_custom_call.1} parent=1 // pred_fallthru
      _
    // Predicated region
    $region38: #{tpu_custom_call.1} parent=1 // pred_check
      _
    $region39: #{tpu_custom_call.1} parent=1 // pred_check_branch
      %85 = sbr.rel (0) target = $region41
    $region40: #{tpu_custom_call.1} parent=1 // pred_region
      %86 = dma.done [#allocation3], 128
    $region41: #{tpu_custom_call.1} parent=1 // pred_fallthru
      _
    // Predicated region
    $region42: #{tpu_custom_call.1} parent=1 // pred_check
      _
    $region43: #{tpu_custom_call.1} parent=1 // pred_check_branch
      %88 = sbr.rel (0) target = $region45
    $region44: #{tpu_custom_call.1} parent=1 // pred_region
      %89 = dma.done [#allocation6], 2048
    $region45: #{tpu_custom_call.1} parent=1 // pred_fallthru
      _
    // Predicated region
    $region46: #{tpu_custom_call.1} parent=1 // pred_check
      _
    $region47: #{tpu_custom_call.1} parent=1 // pred_check_branch
      %91 = sbr.rel (0) target = $region49
    $region48: #{tpu_custom_call.1} parent=1 // pred_region
      %92 = dma.done [#allocation6], 2048
    $region49: #{tpu_custom_call.1} parent=1 // pred_fallthru
      _
    // Predicated region
    $region50: #{tpu_custom_call.1} parent=1 // pred_check
      _
    $region51: #{tpu_custom_call.1} parent=1 // pred_check_branch
      %94 = sbr.rel (0) target = $region53
    $region52: #{tpu_custom_call.1} parent=1 // pred_region
      %95 = dma.done [#allocation9], 2048
    $region53: #{tpu_custom_call.1} parent=1 // pred_fallthru
      _
    // Predicated region
    $region54: #{tpu_custom_call.1} parent=1 // pred_check
      _
    $region55: #{tpu_custom_call.1} parent=1 // pred_check_branch
      %97 = sbr.rel (0) target = $region57
    $region56: #{tpu_custom_call.1} parent=1 // pred_region
      %98 = dma.done [#allocation9], 2048
    $region57: #{tpu_custom_call.1} parent=1 // pred_fallthru
      _
    %v99 = vld [vmem:[#allocation2] sm:$0xff]
    %v100 = vld [vmem:[#allocation5] sm:$0xff]
    %v101 = vld [vmem:[#allocation5 + $0x8] sm:$0xff]
    %v102 = vld [vmem:[#allocation5 + $0x10] sm:$0xff]
    %v103 = vld [vmem:[#allocation5 + $0x18] sm:$0xff]
    %v104 = vld [vmem:[#allocation5 + $0x20] sm:$0xff]
    %v105 = vld [vmem:[#allocation5 + $0x28] sm:$0xff]
    %v106 = vld [vmem:[#allocation5 + $0x30] sm:$0xff]
    %v107 = vld [vmem:[#allocation5 + $0x38] sm:$0xff]
    %v108 = vld [vmem:[#allocation5 + $0x40] sm:$0xff]
    %v109 = vld [vmem:[#allocation5 + $0x48] sm:$0xff]
    %v110 = vld [vmem:[#allocation5 + $0x50] sm:$0xff]
    %v111 = vld [vmem:[#allocation5 + $0x58] sm:$0xff]
    %v112 = vld [vmem:[#allocation5 + $0x60] sm:$0xff]
    %v113 = vld [vmem:[#allocation5 + $0x68] sm:$0xff]
    %v114 = vld [vmem:[#allocation5 + $0x70] sm:$0xff]
    %v115 = vld [vmem:[#allocation5 + $0x78] sm:$0xff]
    %v116 = vld [vmem:[%s2] sm:$0x1]
    %v118 = vlaneseq
    %v119 = vshrl.u32 %v118, 7
    %v120 = vsub.s32 0, %v119
    %v121 = vrot.slane %v116, %v120
    %123 = vmatprep.subr.mxu0 0.0
    %124 = vmatpush1.msra.mxu0 %v100
    %125 = vmatprep.subr.mxu0 0.0
    %126 = vmatpush1.msra.mxu0 %v101
    %127 = vmatprep.subr.mxu0 0.0
    %128 = vmatpush1.msra.mxu0 %v102
    %129 = vmatprep.subr.mxu0 0.0
    %130 = vmatpush1.msra.mxu0 %v103
    %131 = vmatprep.subr.mxu0 0.0
    %132 = vmatpush1.msra.mxu0 %v104
    %133 = vmatprep.subr.mxu0 0.0
    %134 = vmatpush1.msra.mxu0 %v105
    %135 = vmatprep.subr.mxu0 0.0
    %136 = vmatpush1.msra.mxu0 %v106
    %137 = vmatprep.subr.mxu0 0.0
    %138 = vmatpush1.msra.mxu0 %v107
    %139 = vmatprep.subr.mxu0 0.0
    %140 = vmatpush1.msra.mxu0 %v108
    %141 = vmatprep.subr.mxu0 0.0
    %142 = vmatpush1.msra.mxu0 %v109
    %143 = vmatprep.subr.mxu0 0.0
    %144 = vmatpush1.msra.mxu0 %v110
    %145 = vmatprep.subr.mxu0 0.0
    %146 = vmatpush1.msra.mxu0 %v111
    %147 = vmatprep.subr.mxu0 0.0
    %148 = vmatpush1.msra.mxu0 %v112
    %149 = vmatprep.subr.mxu0 0.0
    %150 = vmatpush1.msra.mxu0 %v113
    %151 = vmatprep.subr.mxu0 0.0
    %152 = vmatpush1.msra.mxu0 %v114
    %153 = vmatprep.subr.mxu0 0.0
    %154 = vmatpush1.msra.mxu0 %v115
    %155 = vmatprep.subr.mxu0 0.0
    %156 = vmatpush1.msra.mxu0 0.0
    %157 = vmatprep.subr.mxu0 0.0
    %158 = vmatpush1.msra.mxu0 0.0
    %159 = vmatprep.subr.mxu0 0.0
    %160 = vmatpush1.msra.mxu0 0.0
    %161 = vmatprep.subr.mxu0 0.0
    %162 = vmatpush1.msra.mxu0 0.0
    %163 = vmatprep.subr.mxu0 0.0
    %164 = vmatpush1.msra.mxu0 0.0
    %165 = vmatprep.subr.mxu0 0.0
    %166 = vmatpush1.msra.mxu0 0.0
    %167 = vmatprep.subr.mxu0 0.0
    %168 = vmatpush1.msra.mxu0 0.0
    %169 = vmatprep.subr.mxu0 0.0
    %170 = vmatpush1.msra.mxu0 0.0
    %171 = vmatprep.subr.mxu0 0.0
    %172 = vmatpush1.msra.mxu0 0.0
    %173 = vmatprep.subr.mxu0 0.0
    %174 = vmatpush1.msra.mxu0 0.0
    %175 = vmatprep.subr.mxu0 0.0
    %176 = vmatpush1.msra.mxu0 0.0
    %177 = vmatprep.subr.mxu0 0.0
    %178 = vmatpush1.msra.mxu0 0.0
    %179 = vmatprep.subr.mxu0 0.0
    %180 = vmatpush1.msra.mxu0 0.0
    %181 = vmatprep.subr.mxu0 0.0
    %182 = vmatpush1.msra.mxu0 0.0
    %183 = vmatprep.subr.mxu0 0.0
    %184 = vmatpush1.msra.mxu0 0.0
    %185 = vmatprep.subr.mxu0 0.0
    %186 = vmatpush1.msra.mxu0 0.0
    %187 = vmatprep.mubr.f32.mxu0 0.0
    %188 = vmatmul.mubr.f32.gmra.mrb[0].mxu0 %v99
    %v189 = vpop.f32.mrb[0].mxu0
    %v190 = vadd.f32 %v121, %v189
    %v191 = vpop.f32.mrb[0].mxu0
    %192 = vdwg.mxu0
    %v193 = vtanh.pop %v190
    %v194 = vld [vmem:[#allocation7] sm:$0xff]
    %v195 = vld [vmem:[#allocation7 + $0x8] sm:$0xff]
    %v196 = vld [vmem:[#allocation7 + $0x10] sm:$0xff]
    %v197 = vld [vmem:[#allocation7 + $0x18] sm:$0xff]
    %v198 = vld [vmem:[#allocation7 + $0x20] sm:$0xff]
    %v199 = vld [vmem:[#allocation7 + $0x28] sm:$0xff]
    %v200 = vld [vmem:[#allocation7 + $0x30] sm:$0xff]
    %v201 = vld [vmem:[#allocation7 + $0x38] sm:$0xff]
    %v202 = vld [vmem:[#allocation7 + $0x40] sm:$0xff]
    %v203 = vld [vmem:[#allocation7 + $0x48] sm:$0xff]
    %v204 = vld [vmem:[#allocation7 + $0x50] sm:$0xff]
    %v205 = vld [vmem:[#allocation7 + $0x58] sm:$0xff]
    %v206 = vld [vmem:[#allocation7 + $0x60] sm:$0xff]
    %v207 = vld [vmem:[#allocation7 + $0x68] sm:$0xff]
    %v208 = vld [vmem:[#allocation7 + $0x70] sm:$0xff]
    %v209 = vld [vmem:[#allocation7 + $0x78] sm:$0xff]
    %v210 = vld [vmem:[%s4] sm:$0x1]
    %v212 = vlaneseq
    %v213 = vshrl.u32 %v212, 7
    %v214 = vsub.s32 0, %v213
    %v215 = vrot.slane %v210, %v214
    %217 = vmatprep.subr.mxu0 0.0
    %218 = vmatpush1.msra.mxu0 %v194
    %219 = vmatprep.subr.mxu0 0.0
    %220 = vmatpush1.msra.mxu0 %v195
    %221 = vmatprep.subr.mxu0 0.0
    %222 = vmatpush1.msra.mxu0 %v196
    %223 = vmatprep.subr.mxu0 0.0
    %224 = vmatpush1.msra.mxu0 %v197
    %225 = vmatprep.subr.mxu0 0.0
    %226 = vmatpush1.msra.mxu0 %v198
    %227 = vmatprep.subr.mxu0 0.0
    %228 = vmatpush1.msra.mxu0 %v199
    %229 = vmatprep.subr.mxu0 0.0
    %230 = vmatpush1.msra.mxu0 %v200
    %231 = vmatprep.subr.mxu0 0.0
    %232 = vmatpush1.msra.mxu0 %v201
    %233 = vmatprep.subr.mxu0 0.0
    %234 = vmatpush1.msra.mxu0 %v202
    %235 = vmatprep.subr.mxu0 0.0
    %236 = vmatpush1.msra.mxu0 %v203
    %237 = vmatprep.subr.mxu0 0.0
    %238 = vmatpush1.msra.mxu0 %v204
    %239 = vmatprep.subr.mxu0 0.0
    %240 = vmatpush1.msra.mxu0 %v205
    %241 = vmatprep.subr.mxu0 0.0
    %242 = vmatpush1.msra.mxu0 %v206
    %243 = vmatprep.subr.mxu0 0.0
    %244 = vmatpush1.msra.mxu0 %v207
    %245 = vmatprep.subr.mxu0 0.0
    %246 = vmatpush1.msra.mxu0 %v208
    %247 = vmatprep.subr.mxu0 0.0
    %248 = vmatpush1.msra.mxu0 %v209
    %249 = vmatprep.subr.mxu0 0.0
    %250 = vmatpush1.msra.mxu0 0.0
    %251 = vmatprep.subr.mxu0 0.0
    %252 = vmatpush1.msra.mxu0 0.0
    %253 = vmatprep.subr.mxu0 0.0
    %254 = vmatpush1.msra.mxu0 0.0
    %255 = vmatprep.subr.mxu0 0.0
    %256 = vmatpush1.msra.mxu0 0.0
    %257 = vmatprep.subr.mxu0 0.0
    %258 = vmatpush1.msra.mxu0 0.0
    %259 = vmatprep.subr.mxu0 0.0
    %260 = vmatpush1.msra.mxu0 0.0
    %261 = vmatprep.subr.mxu0 0.0
    %262 = vmatpush1.msra.mxu0 0.0
    %263 = vmatprep.subr.mxu0 0.0
    %264 = vmatpush1.msra.mxu0 0.0
    %265 = vmatprep.subr.mxu0 0.0
    %266 = vmatpush1.msra.mxu0 0.0
    %267 = vmatprep.subr.mxu0 0.0
    %268 = vmatpush1.msra.mxu0 0.0
    %269 = vmatprep.subr.mxu0 0.0
    %270 = vmatpush1.msra.mxu0 0.0
    %271 = vmatprep.subr.mxu0 0.0
    %272 = vmatpush1.msra.mxu0 0.0
    %273 = vmatprep.subr.mxu0 0.0
    %274 = vmatpush1.msra.mxu0 0.0
    %275 = vmatprep.subr.mxu0 0.0
    %276 = vmatpush1.msra.mxu0 0.0
    %277 = vmatprep.subr.mxu0 0.0
    %278 = vmatpush1.msra.mxu0 0.0
    %279 = vmatprep.subr.mxu0 0.0
    %280 = vmatpush1.msra.mxu0 0.0
    %281 = vmatprep.mubr.f32.mxu0 0.0
    %282 = vmatmul.mubr.f32.gmra.mrb[0].mxu0 %v193
    %v283 = vpop.f32.mrb[0].mxu0
    %v284 = vadd.f32 %v215, %v283
    %v285 = vpop.f32.mrb[0].mxu0
    %286 = vdwg.mxu0
    %v287 = vtanh.pop %v284
    %v288 = vld [vmem:[#allocation8] sm:$0xff]
    %v289 = vld [vmem:[#allocation8 + $0x8] sm:$0xff]
    %v290 = vld [vmem:[#allocation8 + $0x10] sm:$0xff]
    %v291 = vld [vmem:[#allocation8 + $0x18] sm:$0xff]
    %v292 = vld [vmem:[#allocation8 + $0x20] sm:$0xff]
    %v293 = vld [vmem:[#allocation8 + $0x28] sm:$0xff]
    %v294 = vld [vmem:[#allocation8 + $0x30] sm:$0xff]
    %v295 = vld [vmem:[#allocation8 + $0x38] sm:$0xff]
    %v296 = vld [vmem:[#allocation8 + $0x40] sm:$0xff]
    %v297 = vld [vmem:[#allocation8 + $0x48] sm:$0xff]
    %v298 = vld [vmem:[#allocation8 + $0x50] sm:$0xff]
    %v299 = vld [vmem:[#allocation8 + $0x58] sm:$0xff]
    %v300 = vld [vmem:[#allocation8 + $0x60] sm:$0xff]
    %v301 = vld [vmem:[#allocation8 + $0x68] sm:$0xff]
    %v302 = vld [vmem:[#allocation8 + $0x70] sm:$0xff]
    %v303 = vld [vmem:[#allocation8 + $0x78] sm:$0xff]
    %v304 = vld [vmem:[%s6] sm:$0x1]
    %v306 = vlaneseq
    %v307 = vshrl.u32 %v306, 7
    %v308 = vsub.s32 0, %v307
    %v309 = vrot.slane %v304, %v308
    %311 = vmatprep.subr.mxu0 0.0
    %312 = vmatpush1.msra.mxu0 %v288
    %313 = vmatprep.subr.mxu0 0.0
    %314 = vmatpush1.msra.mxu0 %v289
    %315 = vmatprep.subr.mxu0 0.0
    %316 = vmatpush1.msra.mxu0 %v290
    %317 = vmatprep.subr.mxu0 0.0
    %318 = vmatpush1.msra.mxu0 %v291
    %319 = vmatprep.subr.mxu0 0.0
    %320 = vmatpush1.msra.mxu0 %v292
    %321 = vmatprep.subr.mxu0 0.0
    %322 = vmatpush1.msra.mxu0 %v293
    %323 = vmatprep.subr.mxu0 0.0
    %324 = vmatpush1.msra.mxu0 %v294
    %325 = vmatprep.subr.mxu0 0.0
    %326 = vmatpush1.msra.mxu0 %v295
    %327 = vmatprep.subr.mxu0 0.0
    %328 = vmatpush1.msra.mxu0 %v296
    %329 = vmatprep.subr.mxu0 0.0
    %330 = vmatpush1.msra.mxu0 %v297
    %331 = vmatprep.subr.mxu0 0.0
    %332 = vmatpush1.msra.mxu0 %v298
    %333 = vmatprep.subr.mxu0 0.0
    %334 = vmatpush1.msra.mxu0 %v299
    %335 = vmatprep.subr.mxu0 0.0
    %336 = vmatpush1.msra.mxu0 %v300
    %337 = vmatprep.subr.mxu0 0.0
    %338 = vmatpush1.msra.mxu0 %v301
    %339 = vmatprep.subr.mxu0 0.0
    %340 = vmatpush1.msra.mxu0 %v302
    %341 = vmatprep.subr.mxu0 0.0
    %342 = vmatpush1.msra.mxu0 %v303
    %343 = vmatprep.subr.mxu0 0.0
    %344 = vmatpush1.msra.mxu0 0.0
    %345 = vmatprep.subr.mxu0 0.0
    %346 = vmatpush1.msra.mxu0 0.0
    %347 = vmatprep.subr.mxu0 0.0
    %348 = vmatpush1.msra.mxu0 0.0
    %349 = vmatprep.subr.mxu0 0.0
    %350 = vmatpush1.msra.mxu0 0.0
    %351 = vmatprep.subr.mxu0 0.0
    %352 = vmatpush1.msra.mxu0 0.0
    %353 = vmatprep.subr.mxu0 0.0
    %354 = vmatpush1.msra.mxu0 0.0
    %355 = vmatprep.subr.mxu0 0.0
    %356 = vmatpush1.msra.mxu0 0.0
    %357 = vmatprep.subr.mxu0 0.0
    %358 = vmatpush1.msra.mxu0 0.0
    %359 = vmatprep.subr.mxu0 0.0
    %360 = vmatpush1.msra.mxu0 0.0
    %361 = vmatprep.subr.mxu0 0.0
    %362 = vmatpush1.msra.mxu0 0.0
    %363 = vmatprep.subr.mxu0 0.0
    %364 = vmatpush1.msra.mxu0 0.0
    %365 = vmatprep.subr.mxu0 0.0
    %366 = vmatpush1.msra.mxu0 0.0
    %367 = vmatprep.subr.mxu0 0.0
    %368 = vmatpush1.msra.mxu0 0.0
    %369 = vmatprep.subr.mxu0 0.0
    %370 = vmatpush1.msra.mxu0 0.0
    %371 = vmatprep.subr.mxu0 0.0
    %372 = vmatpush1.msra.mxu0 0.0
    %373 = vmatprep.subr.mxu0 0.0
    %374 = vmatpush1.msra.mxu0 0.0
    %375 = vmatprep.mubr.f32.mxu0 0.0
    %376 = vmatmul.mubr.f32.gmra.mrb[0].mxu0 %v287
    %v377 = vpop.f32.mrb[0].mxu0
    %v378 = vadd.f32 %v309, %v377
    %v379 = vpop.f32.mrb[0].mxu0
    %380 = vdwg.mxu0
    %v381 = vtanh.pop %v378
    %v382 = vld [vmem:[#allocation10] sm:$0xff]
    %v383 = vld [vmem:[#allocation10 + $0x8] sm:$0xff]
    %v384 = vld [vmem:[#allocation10 + $0x10] sm:$0xff]
    %v385 = vld [vmem:[#allocation10 + $0x18] sm:$0xff]
    %v386 = vld [vmem:[#allocation10 + $0x20] sm:$0xff]
    %v387 = vld [vmem:[#allocation10 + $0x28] sm:$0xff]
    %v388 = vld [vmem:[#allocation10 + $0x30] sm:$0xff]
    %v389 = vld [vmem:[#allocation10 + $0x38] sm:$0xff]
    %v390 = vld [vmem:[#allocation10 + $0x40] sm:$0xff]
    %v391 = vld [vmem:[#allocation10 + $0x48] sm:$0xff]
    %v392 = vld [vmem:[#allocation10 + $0x50] sm:$0xff]
    %v393 = vld [vmem:[#allocation10 + $0x58] sm:$0xff]
    %v394 = vld [vmem:[#allocation10 + $0x60] sm:$0xff]
    %v395 = vld [vmem:[#allocation10 + $0x68] sm:$0xff]
    %v396 = vld [vmem:[#allocation10 + $0x70] sm:$0xff]
    %v397 = vld [vmem:[#allocation10 + $0x78] sm:$0xff]
    %v398 = vld [vmem:[%s8] sm:$0x1]
    %v400 = vlaneseq
    %v401 = vshrl.u32 %v400, 7
    %v402 = vsub.s32 0, %v401
    %v403 = vrot.slane %v398, %v402
    %405 = vmatprep.subr.mxu0 0.0
    %406 = vmatpush1.msra.mxu0 %v382
    %407 = vmatprep.subr.mxu0 0.0
    %408 = vmatpush1.msra.mxu0 %v383
    %409 = vmatprep.subr.mxu0 0.0
    %410 = vmatpush1.msra.mxu0 %v384
    %411 = vmatprep.subr.mxu0 0.0
    %412 = vmatpush1.msra.mxu0 %v385
    %413 = vmatprep.subr.mxu0 0.0
    %414 = vmatpush1.msra.mxu0 %v386
    %415 = vmatprep.subr.mxu0 0.0
    %416 = vmatpush1.msra.mxu0 %v387
    %417 = vmatprep.subr.mxu0 0.0
    %418 = vmatpush1.msra.mxu0 %v388
    %419 = vmatprep.subr.mxu0 0.0
    %420 = vmatpush1.msra.mxu0 %v389
    %421 = vmatprep.subr.mxu0 0.0
    %422 = vmatpush1.msra.mxu0 %v390
    %423 = vmatprep.subr.mxu0 0.0
    %424 = vmatpush1.msra.mxu0 %v391
    %425 = vmatprep.subr.mxu0 0.0
    %426 = vmatpush1.msra.mxu0 %v392
    %427 = vmatprep.subr.mxu0 0.0
    %428 = vmatpush1.msra.mxu0 %v393
    %429 = vmatprep.subr.mxu0 0.0
    %430 = vmatpush1.msra.mxu0 %v394
    %431 = vmatprep.subr.mxu0 0.0
    %432 = vmatpush1.msra.mxu0 %v395
    %433 = vmatprep.subr.mxu0 0.0
    %434 = vmatpush1.msra.mxu0 %v396
    %435 = vmatprep.subr.mxu0 0.0
    %436 = vmatpush1.msra.mxu0 %v397
    %437 = vmatprep.subr.mxu0 0.0
    %438 = vmatpush1.msra.mxu0 0.0
    %439 = vmatprep.subr.mxu0 0.0
    %440 = vmatpush1.msra.mxu0 0.0
    %441 = vmatprep.subr.mxu0 0.0
    %442 = vmatpush1.msra.mxu0 0.0
    %443 = vmatprep.subr.mxu0 0.0
    %444 = vmatpush1.msra.mxu0 0.0
    %445 = vmatprep.subr.mxu0 0.0
    %446 = vmatpush1.msra.mxu0 0.0
    %447 = vmatprep.subr.mxu0 0.0
    %448 = vmatpush1.msra.mxu0 0.0
    %449 = vmatprep.subr.mxu0 0.0
    %450 = vmatpush1.msra.mxu0 0.0
    %451 = vmatprep.subr.mxu0 0.0
    %452 = vmatpush1.msra.mxu0 0.0
    %453 = vmatprep.subr.mxu0 0.0
    %454 = vmatpush1.msra.mxu0 0.0
    %455 = vmatprep.subr.mxu0 0.0
    %456 = vmatpush1.msra.mxu0 0.0
    %457 = vmatprep.subr.mxu0 0.0
    %458 = vmatpush1.msra.mxu0 0.0
    %459 = vmatprep.subr.mxu0 0.0
    %460 = vmatpush1.msra.mxu0 0.0
    %461 = vmatprep.subr.mxu0 0.0
    %462 = vmatpush1.msra.mxu0 0.0
    %463 = vmatprep.subr.mxu0 0.0
    %464 = vmatpush1.msra.mxu0 0.0
    %465 = vmatprep.subr.mxu0 0.0
    %466 = vmatpush1.msra.mxu0 0.0
    %467 = vmatprep.subr.mxu0 0.0
    %468 = vmatpush1.msra.mxu0 0.0
    %469 = vmatprep.mubr.f32.mxu0 0.0
    %470 = vmatmul.mubr.f32.gmra.mrb[0].mxu0 %v381
    %v471 = vpop.f32.mrb[0].mxu0
    %v472 = vadd.f32 %v403, %v471
    %v473 = vpop.f32.mrb[0].mxu0
    %474 = vdwg.mxu0
    %v475 = vmul.f32 %v472, 0.5
    %v476 = vtanh.pop %v475
    %v477 = vadd.f32 %v476, 1.0
    %v478 = vmul.f32 %v477, 0.5
    %479 = vst [vmem:[#allocation11] sm:$0xff] %v478
    // Predicated region
    $region58: #{tpu_custom_call.1} parent=1 // pred_check
      _
    $region59: #{tpu_custom_call.1} parent=1 // pred_check_branch
      %481 = sbr.rel (0) target = $region61
    $region60: #{tpu_custom_call.1} parent=1 // pred_region
      %s483 = ssub.s32 128, 128
      %484 = vsyncadd [#allocation4], %s483
      %s486 = sshll.u32 [#allocation11], 4
      %s487 = int_to_ptr.vmem [resolvable:$true] %s486
      %489 = dma.vmem_to_hbm [thread:$0]  %s487, 128, %s9, [#allocation4]
    $region61: #{tpu_custom_call.1} parent=1 // pred_fallthru
      _
    // Predicated region
    $region62: #{tpu_custom_call.1} parent=1 // pred_check
      _
    $region63: #{tpu_custom_call.1} parent=1 // pred_check_branch
      %491 = sbr.rel (0) target = $region65
    $region64: #{tpu_custom_call.1} parent=1 // pred_region
      %492 = dma.done [#allocation4], 128
    $region65: #{tpu_custom_call.1} parent=1 // pred_fallthru
      _
    %493 = vsyncpa [#allocation3], 1
    %494 = vsyncpa [#allocation6], 1
    %495 = vsyncpa [#allocation9], 1
    %496 = vsyncpa [#allocation4], 1

</llo_original>
